<compile_context>
chip_gen: v5e
topology: v5e:2x2
jax: 0.10.0
libtpu: 0.0.40
codegen_flags: <defaults>
</compile_context>

<pallas_src>
import functools

import jax
import jax.numpy as jnp
from jax.experimental import pallas as pl
from jax.experimental.pallas import tpu as pltpu


def _round_up(x: int, m: int) -> int:
    return (x + m - 1) // m * m


@functools.lru_cache(maxsize=None)
def _vmem_capacity_bytes() -> int:
    """Physical VMEM per TensorCore (conservative default if undetectable)."""
    try:
        return int(pltpu.get_tpu_info().vmem_capacity_bytes)
    except Exception:
        return 64 * 2 ** 20  # v7x per-TC VMEM -- the smallest of the family.


@functools.lru_cache(maxsize=None)
def _tensorcores_per_chip() -> int:
    try:
        kind = jax.devices()[0].device_kind.lower()
    except Exception:
        return 1
    return 2 if "v7" in kind else 1  # v5e/v6e: 1 TC; v7x: 2 TCs.


@functools.lru_cache(maxsize=None)
def _single_buffer_supported() -> bool:
    """Explicit one-time capability probe: does pl.Buffered(1) single-buffering
    of a grid-invariant parameter block compile, run, and give correct numbers?
    (The real pallas_call below never wraps itself in a silent fallback.)"""
    if not hasattr(pl, "Buffered"):
        return False

    def probe_kernel(x_ref, w_ref, o_ref):
        o_ref[...] = x_ref[...] + w_ref[...]

    try:
        probe = pl.pallas_call(
            probe_kernel,
            out_shape=jax.ShapeDtypeStruct((16, 128), jnp.float32),
            grid_spec=pltpu.PrefetchScalarGridSpec(
                num_scalar_prefetch=0,
                grid=(2,),
                in_specs=[
                    pl.BlockSpec((8, 128), lambda i: (i, 0)),
                    pl.BlockSpec((8, 128), lambda i: (0, 0),
                                 pipeline_mode=pl.Buffered(1)),
                ],
                out_specs=pl.BlockSpec((8, 128), lambda i: (i, 0)),
            ),
        )
        x = jnp.arange(16 * 128, dtype=jnp.float32).reshape(16, 128) * 1e-3
        w = jnp.ones((8, 128), jnp.float32)
        got = jax.jit(probe)(x, w)
        want = x + jnp.tile(w, (2, 1))
        return bool(jnp.allclose(got, want, atol=1e-6))
    except Exception:  # capability probe only; real calls never reach here
        return False


# ----------------------------------------------------------------------------
# Kernel
# ----------------------------------------------------------------------------
def _leaf_kernel(x_ref, w_ref, b_ref, hidden_ref, cell_ref):
    x = x_ref[...]  # (tm, D_pad), lane-dense

    # Two MXU passes over the same resident x tile (cell / gate halves of the
    # stacked weight); f32 accumulation, hoisted bias broadcast-adds.
    cell = jnp.dot(x, w_ref[0], preferred_element_type=jnp.float32) + b_ref[0]
    gate_z = jnp.dot(x, w_ref[1], preferred_element_type=jnp.float32) + b_ref[1]

    # sigmoid(z) == 0.5 * (tanh(z/2) + 1): one EUP transcendental instead of
    # two (exp + reciprocal) -- cuts the EUP critical path for small D_pad.
    gate = 0.5 * (jnp.tanh(0.5 * gate_z) + 1.0)
    hidden = gate * jnp.tanh(cell)

    cell_ref[...] = cell.astype(cell_ref.dtype)
    hidden_ref[...] = hidden.astype(hidden_ref.dtype)


# ----------------------------------------------------------------------------
# pallas_call builder (cached so repeated forwards reuse the same callable)
# ----------------------------------------------------------------------------
@functools.lru_cache(maxsize=None)
def _build_call(B_pad, D_pad, H_pad, tm, tn, in_dtype_name, out_dtype_name,
                single_buffer_params):
    in_dtype = jnp.dtype(in_dtype_name)
    out_dtype = jnp.dtype(out_dtype_name)
    ni = B_pad // tm
    nj = H_pad // tn
    in_isz = in_dtype.itemsize
    out_isz = out_dtype.itemsize
    n_buf_w = 1 if single_buffer_params else 2

    param_kwargs = {}
    if single_buffer_params:
        # Grid-invariant weights/bias: a second pipeline buffer is VMEM waste.
        param_kwargs["pipeline_mode"] = pl.Buffered(1)

    # Resident VMEM: x (double-buffered) + stacked W/b + 2 outputs
    # (double-buffered) + f32 intermediates (cell, gate_z, hidden).
    vmem_est = (2 * tm * D_pad * in_isz
                + n_buf_w * 2 * (D_pad * tn * in_isz + tn * 4)
                + 2 * 2 * tm * tn * out_isz
                + 3 * tm * tn * 4)
    vmem_limit = int(max(16 * 2 ** 20,
                         min(_vmem_capacity_bytes(), vmem_est + 8 * 2 ** 20)))

    flops = int(2 * B_pad * D_pad * (2 * H_pad) + 6 * B_pad * H_pad)
    transcendentals = int(2 * B_pad * H_pad)
    param_fetches = 1 if nj == 1 else ni  # weights re-streamed per batch tile when N-tiled
    bytes_accessed = int(B_pad * D_pad * in_isz
                         + param_fetches * (2 * D_pad * H_pad * in_isz + 2 * H_pad * 4)
                         + 2 * B_pad * H_pad * out_isz)

    return pl.pallas_call(
        _leaf_kernel,
        out_shape=(
            jax.ShapeDtypeStruct((B_pad, H_pad), out_dtype),  # hidden_state
            jax.ShapeDtypeStruct((B_pad, H_pad), out_dtype),  # cell_state
        ),
        grid_spec=pltpu.PrefetchScalarGridSpec(
            num_scalar_prefetch=0,
            grid=(ni, nj),
            in_specs=[
                pl.BlockSpec((tm, D_pad), lambda i, j: (i, 0)),             # x tile
                pl.BlockSpec((2, D_pad, tn), lambda i, j: (0, 0, j),
                             **param_kwargs),                               # [W_in^T ; W_out^T]
                pl.BlockSpec((2, 1, tn), lambda i, j: (0, 0, j),
                             **param_kwargs),                               # [b_in ; b_out]
            ],
            out_specs=[
                pl.BlockSpec((tm, tn), lambda i, j: (i, j)),                # hidden
                pl.BlockSpec((tm, tn), lambda i, j: (i, j)),                # cell
            ],
        ),
        compiler_params=pltpu.CompilerParams(
            dimension_semantics=("parallel", "parallel"),
            vmem_limit_bytes=vmem_limit),
        cost_estimate=pl.CostEstimate(
            flops=flops,
            transcendentals=transcendentals,
            bytes_accessed=bytes_accessed),
    )


# ----------------------------------------------------------------------------
# Tile selection
# ----------------------------------------------------------------------------
def _tn_options(H_pad):
    """Descending list of hidden-dim tile sizes (multiples of 128 dividing H_pad)."""
    n = H_pad // 128
    divs = [d for d in range(1, n + 1) if n % d == 0]
    return [128 * d for d in sorted(divs, reverse=True)]


def _choose_tiles(B8, D_pad, H_pad, in_isz, out_isz, n_cores, tm_cap):
    budget = int(0.75 * _vmem_capacity_bytes())

    if n_cores >= 2 and B8 >= 16:
        # v7x: >=2 batch steps so both TensorCores get work.
        tm = min(tm_cap, _round_up(pl.cdiv(B8, 2), 8))
    else:
        # Single TC (v5e/v6e): one big tile per step -- the grid is a serial loop.
        tm = min(tm_cap, B8)

    opts = _tn_options(H_pad)
    ti = 0
    tn = opts[ti]

    def est(tm_, tn_):
        return (2 * tm_ * D_pad * in_isz
                + 2 * 2 * (D_pad * tn_ * in_isz + tn_ * 4)   # conservative: 2 buffers
                + 2 * 2 * tm_ * tn_ * out_isz
                + 3 * tm_ * tn_ * 4)

    while est(tm, tn) > budget:
        w_bytes = 2 * 2 * D_pad * tn * in_isz
        x_bytes = 2 * tm * D_pad * in_isz
        can_shrink_tn = ti + 1 < len(opts)
        if can_shrink_tn and (w_bytes >= x_bytes or tm <= 8):
            ti += 1
            tn = opts[ti]
        elif tm > 8:
            tm = max(8, _round_up(tm // 2, 8))
        else:
            break
    return tm, tn


# ----------------------------------------------------------------------------
# Public API
# ----------------------------------------------------------------------------
def prepare_leaf_params(w_in, b_in, w_out, b_out, *, param_dtype=None):
    """Fuse / transpose / zero-pad the two nn.Linear layers ONCE.

    w_*: (H, D_in) PyTorch nn.Linear weight layout; b_*: (H,).
    param_dtype: optional compute dtype for x/W (e.g. jnp.bfloat16 on v6e/v7x
                 to halve HBM traffic); MXU accumulation and activations stay f32.
    Returns a params dict that can be reused across forward calls.
    """
    H, D_in = w_in.shape
    assert w_out.shape == (H, D_in) and b_in.shape == (H,) and b_out.shape == (H,)
    p_dtype = jnp.dtype(param_dtype) if param_dtype is not None else jnp.dtype(w_in.dtype)

    D_pad = _round_up(D_in, 128)
    H_pad = _round_up(H, 128)

    def pad_wt(w):   # (H, D_in) -> (D_pad, H_pad): transpose + zero pad (exact)
        return jnp.zeros((D_pad, H_pad), p_dtype).at[:D_in, :H].set(w.T.astype(p_dtype))

    def pad_b(b):    # (H,) -> (1, H_pad), kept f32
        return jnp.zeros((1, H_pad), jnp.float32).at[0, :H].set(b.astype(jnp.float32))

    w_stacked = jnp.stack([pad_wt(w_in), pad_wt(w_out)], axis=0)   # (2, D_pad, H_pad)
    b_stacked = jnp.stack([pad_b(b_in), pad_b(b_out)], axis=0)     # (2, 1, H_pad)
    return dict(w=w_stacked, b=b_stacked, D_in=D_in, H=H,
                D_pad=D_pad, H_pad=H_pad, param_dtype=p_dtype)


def leaf_apply(x, params, *, tm_cap=1024):
    """Forward pass using pre-fused parameters. Returns (hidden, cell), (B, H)."""
    B, D_in = x.shape
    assert D_in == params["D_in"]
    H, D_pad, H_pad = params["H"], params["D_pad"], params["H_pad"]
    compute_dtype = params["param_dtype"]
    out_dtype = x.dtype

    n_cores = _tensorcores_per_chip()
    B8 = _round_up(max(B, 1), 8)
    tm, tn = _choose_tiles(B8, D_pad, H_pad,
                           jnp.dtype(compute_dtype).itemsize,
                           jnp.dtype(out_dtype).itemsize,
                           n_cores, tm_cap)

    B_pad = _round_up(B8, tm)
    ni = B_pad // tm
    if n_cores >= 2 and ni > 1 and ni % 2 == 1:
        B_pad += tm      # even batch grid: both v7x TensorCores stay busy
        ni += 1
    nj = H_pad // tn

    single_buf = _single_buffer_supported() and nj == 1  # only when truly grid-invariant

    # Skip the extra HBM pad pass when x is already tile/lane aligned.
    if B_pad == B and D_pad == D_in and x.dtype == compute_dtype:
        x_in = x
    else:
        x_in = jnp.zeros((B_pad, D_pad), compute_dtype).at[:B, :D_in].set(
            x.astype(compute_dtype))

    call = _build_call(B_pad, D_pad, H_pad, tm, tn,
                       jnp.dtype(compute_dtype).name, jnp.dtype(out_dtype).name,
                       single_buf)
    hidden, cell = call(x_in, params["w"], params["b"])

    if B_pad == B and H_pad == H:
        return hidden, cell
    return hidden[:B, :H], cell[:B, :H]


def leaf_module_forward(x, w_in, b_in, w_out, b_out, *, param_dtype=None, tm_cap=1024):
    """Convenience one-shot forward (prepares params inline)."""
    params = prepare_leaf_params(w_in, b_in, w_out, b_out, param_dtype=param_dtype)
    return leaf_apply(x, params, tm_cap=tm_cap)


def _reference(x, w_in, b_in, w_out, b_out):
    cell = x @ w_in.T + b_in
    hidden = jax.nn.sigmoid(x @ w_out.T + b_out) * jnp.tanh(cell)
    return hidden, cell


if __name__ == "__main__":
    key = jax.random.PRNGKey(0)
    k_x, k_wi, k_bi, k_wo, k_bo = jax.random.split(key, 5)

    B, D_in, H = 16, 32, 32  # small, forward-consistent shapes

    x = jax.random.normal(k_x, (B, D_in), dtype=jnp.float32)
    # Deterministic synthetic parameters (PyTorch nn.Linear layout: (H, D_in)).
    w_in = jax.random.normal(k_wi, (H, D_in), dtype=jnp.float32) * 0.1
    b_in = jax.random.normal(k_bi, (H,), dtype=jnp.float32) * 0.1
    w_out = jax.random.normal(k_wo, (H, D_in), dtype=jnp.float32) * 0.1
    b_out = jax.random.normal(k_bo, (H,), dtype=jnp.float32) * 0.1

    # f32 path: prepare fused/padded params once, reuse across forward calls.
    params = prepare_leaf_params(w_in, b_in, w_out, b_out)
    hidden, cell = leaf_apply(x, params)
    hidden2, cell2 = leaf_apply(x * 0.5, params)        # reuses cached params/call
    jax.block_until_ready((hidden, cell, hidden2, cell2))

    h_ref, c_ref = _reference(x, w_in, b_in, w_out, b_out)
    assert jnp.allclose(hidden, h_ref, atol=1e-5, rtol=1e-5), "hidden mismatch"
    assert jnp.allclose(cell, c_ref, atol=1e-5, rtol=1e-5), "cell mismatch"
    h_ref2, c_ref2 = _reference(x * 0.5, w_in, b_in, w_out, b_out)
    assert jnp.allclose(hidden2, h_ref2, atol=1e-5, rtol=1e-5), "hidden2 mismatch"
    assert jnp.allclose(cell2, c_ref2, atol=1e-5, rtol=1e-5), "cell2 mismatch"

    # bf16 parameter traffic (halves HBM bytes on v6e/v7x); f32 accumulate +
    # f32 activations, so only a small numerical delta vs the f32 reference.
    params_bf16 = prepare_leaf_params(w_in, b_in, w_out, b_out,
                                      param_dtype=jnp.bfloat16)
    h_bf16, c_bf16 = leaf_apply(x, params_bf16)
    jax.block_until_ready((h_bf16, c_bf16))
    assert jnp.allclose(h_bf16, h_ref, atol=6e-2, rtol=6e-2), "bf16 hidden drifted"
    assert jnp.allclose(c_bf16, c_ref, atol=6e-2, rtol=6e-2), "bf16 cell drifted"

    print("KERNEL_OK")
</pallas_src>

<mosaic_0001>
module attributes {stable_mosaic.version = 11 : i64} {
  func.func @probe_kernel(%arg0: i32, %arg1: memref<8x128xf32, #tpu.memory_space<vmem>>, %arg2: memref<8x128xf32, #tpu.memory_space<vmem>>, %arg3: memref<8x128xf32, #tpu.memory_space<vmem>>) attributes {dimension_semantics = [#tpu.dimension_semantics<arbitrary>], iteration_bounds = array<i64: 2>, scalar_prefetch = 0 : i64, scratch_operands = 0 : i64, tpu.core_type = #tpu.core_type<tc>, window_params = [{transform_indices = @transform_0, window_bounds = array<i64: 8, 128>}, {pipeline_mode = #tpu.pipeline_mode<synchronous>, transform_indices = @transform_1, window_bounds = array<i64: 8, 128>}, {transform_indices = @transform_2, window_bounds = array<i64: 8, 128>}]} {
    %c0 = arith.constant 0 : index
    %c0_0 = arith.constant 0 : index
    %0 = vector.load %arg1[%c0, %c0_0] : memref<8x128xf32, #tpu.memory_space<vmem>>, vector<8x128xf32>
    %c0_1 = arith.constant 0 : index
    %c0_2 = arith.constant 0 : index
    %1 = vector.load %arg2[%c0_1, %c0_2] : memref<8x128xf32, #tpu.memory_space<vmem>>, vector<8x128xf32>
    %2 = arith.addf %0, %1 : vector<8x128xf32>
    %c0_3 = arith.constant 0 : index
    %c0_4 = arith.constant 0 : index
    %3 = vector.load %arg3[%c0_3, %c0_4] : memref<8x128xf32, #tpu.memory_space<vmem>>, vector<8x128xf32>
    tpu.vector_store %arg3[%c0_3, %c0_4], %2 {strides = array<i32>} : memref<8x128xf32, #tpu.memory_space<vmem>>, vector<8x128xf32>,
    return
  }
  func.func @transform_0(%arg0: i32) -> (i32, i32) {
    %c0_i32 = arith.constant 0 : i32
    %c0_i32_0 = arith.constant 0 : i32
    return %arg0, %c0_i32 : i32, i32
  }
  func.func @transform_1(%arg0: i32) -> (i32, i32) {
    %c0_i32 = arith.constant 0 : i32
    %c0_i32_0 = arith.constant 0 : i32
    %c0_i32_1 = arith.constant 0 : i32
    return %c0_i32, %c0_i32_0 : i32, i32
  }
  func.func @transform_2(%arg0: i32) -> (i32, i32) {
    %c0_i32 = arith.constant 0 : i32
    %c0_i32_0 = arith.constant 0 : i32
    return %arg0, %c0_i32 : i32, i32
  }
}

module attributes {stable_mosaic.version = 11 : i64} {
  func.func @_leaf_kernel(%arg0: i32, %arg1: i32, %arg2: memref<16x128xf32, #tpu.memory_space<vmem>>, %arg3: memref<2x128x128xf32, #tpu.memory_space<vmem>>, %arg4: memref<2x1x128xf32, #tpu.memory_space<vmem>>, %arg5: memref<16x128xf32, #tpu.memory_space<vmem>>, %arg6: memref<16x128xf32, #tpu.memory_space<vmem>>) attributes {dimension_semantics = [#tpu.dimension_semantics<parallel>, #tpu.dimension_semantics<parallel>], iteration_bounds = array<i64: 1, 1>, scalar_prefetch = 0 : i64, scratch_operands = 0 : i64, tpu.core_type = #tpu.core_type<tc>, window_params = [{transform_indices = @transform_0, window_bounds = array<i64: 16, 128>}, {transform_indices = @transform_1, window_bounds = array<i64: 2, 128, 128>}, {transform_indices = @transform_2, window_bounds = array<i64: 2, 1, 128>}, {transform_indices = @transform_3, window_bounds = array<i64: 16, 128>}, {transform_indices = @transform_4, window_bounds = array<i64: 16, 128>}]} {
    %c0 = arith.constant 0 : index
    %c0_0 = arith.constant 0 : index
    %0 = vector.load %arg2[%c0, %c0_0] : memref<16x128xf32, #tpu.memory_space<vmem>>, vector<16x128xf32>
    %c0_1 = arith.constant 0 : index
    %c0_2 = arith.constant 0 : index
    %c0_3 = arith.constant 0 : index
    %1 = vector.load %arg3[%c0_1, %c0_2, %c0_3] : memref<2x128x128xf32, #tpu.memory_space<vmem>>, vector<1x128x128xf32>
    %2 = vector.shape_cast %1 : vector<1x128x128xf32> to vector<128x128xf32>
    %cst = arith.constant dense<0.000000e+00> : vector<16x128xf32>
    %3 = tpu.matmul %0, %2, %cst {dimension_numbers = #tpu.dot_dimension_numbers<[1], [0], [0], [1], [0, 0, 1, 1], [], []>} : vector<16x128xf32>, vector<128x128xf32>, vector<16x128xf32> -> vector<16x128xf32>
    %c0_4 = arith.constant 0 : index
    %c0_5 = arith.constant 0 : index
    %c0_6 = arith.constant 0 : index
    %4 = vector.load %arg4[%c0_4, %c0_5, %c0_6] : memref<2x1x128xf32, #tpu.memory_space<vmem>>, vector<1x1x128xf32>
    %5 = vector.shape_cast %4 : vector<1x1x128xf32> to vector<1x128xf32>
    %6 = vector.broadcast %5 : vector<1x128xf32> to vector<16x128xf32>
    %7 = arith.addf %3, %6 : vector<16x128xf32>
    %c1 = arith.constant 1 : index
    %c0_7 = arith.constant 0 : index
    %c0_8 = arith.constant 0 : index
    %8 = vector.load %arg3[%c1, %c0_7, %c0_8] : memref<2x128x128xf32, #tpu.memory_space<vmem>>, vector<1x128x128xf32>
    %9 = vector.shape_cast %8 : vector<1x128x128xf32> to vector<128x128xf32>
    %cst_9 = arith.constant dense<0.000000e+00> : vector<16x128xf32>
    %10 = tpu.matmul %0, %9, %cst_9 {dimension_numbers = #tpu.dot_dimension_numbers<[1], [0], [0], [1], [0, 0, 1, 1], [], []>} : vector<16x128xf32>, vector<128x128xf32>, vector<16x128xf32> -> vector<16x128xf32>
    %c1_10 = arith.constant 1 : index
    %c0_11 = arith.constant 0 : index
    %c0_12 = arith.constant 0 : index
    %11 = vector.load %arg4[%c1_10, %c0_11, %c0_12] : memref<2x1x128xf32, #tpu.memory_space<vmem>>, vector<1x1x128xf32>
    %12 = vector.shape_cast %11 : vector<1x1x128xf32> to vector<1x128xf32>
    %13 = vector.broadcast %12 : vector<1x128xf32> to vector<16x128xf32>
    %14 = arith.addf %10, %13 : vector<16x128xf32>
    %cst_13 = arith.constant 5.000000e-01 : f32
    %15 = vector.broadcast %cst_13 : f32 to vector<16x128xf32>
    %16 = arith.mulf %15, %14 : vector<16x128xf32>
    %17 = math.tanh %16 : vector<16x128xf32>
    %cst_14 = arith.constant 1.000000e+00 : f32
    %18 = vector.broadcast %cst_14 : f32 to vector<16x128xf32>
    %19 = arith.addf %17, %18 : vector<16x128xf32>
    %cst_15 = arith.constant 5.000000e-01 : f32
    %20 = vector.broadcast %cst_15 : f32 to vector<16x128xf32>
    %21 = arith.mulf %20, %19 : vector<16x128xf32>
    %22 = math.tanh %7 : vector<16x128xf32>
    %23 = arith.mulf %21, %22 : vector<16x128xf32>
    %c0_16 = arith.constant 0 : index
    %c0_17 = arith.constant 0 : index
    %24 = vector.load %arg6[%c0_16, %c0_17] : memref<16x128xf32, #tpu.memory_space<vmem>>, vector<16x128xf32>
    tpu.vector_store %arg6[%c0_16, %c0_17], %7 {strides = array<i32>} : memref<16x128xf32, #tpu.memory_space<vmem>>, vector<16x128xf32>,
    %c0_18 = arith.constant 0 : index
    %c0_19 = arith.constant 0 : index
    %25 = vector.load %arg5[%c0_18, %c0_19] : memref<16x128xf32, #tpu.memory_space<vmem>>, vector<16x128xf32>
    tpu.vector_store %arg5[%c0_18, %c0_19], %23 {strides = array<i32>} : memref<16x128xf32, #tpu.memory_space<vmem>>, vector<16x128xf32>,
    return
  }
  func.func @transform_0(%arg0: i32, %arg1: i32) -> (i32, i32) {
    %c0_i32 = arith.constant 0 : i32
    %c0_i32_0 = arith.constant 0 : i32
    return %arg0, %c0_i32 : i32, i32
  }
  func.func @transform_1(%arg0: i32, %arg1: i32) -> (i32, i32, i32) {
    %c0_i32 = arith.constant 0 : i32
    %c0_i32_0 = arith.constant 0 : i32
    %c0_i32_1 = arith.constant 0 : i32
    return %c0_i32, %c0_i32_0, %arg1 : i32, i32, i32
  }
  func.func @transform_2(%arg0: i32, %arg1: i32) -> (i32, i32, i32) {
    %c0_i32 = arith.constant 0 : i32
    %c0_i32_0 = arith.constant 0 : i32
    %c0_i32_1 = arith.constant 0 : i32
    return %c0_i32, %c0_i32_0, %arg1 : i32, i32, i32
  }
  func.func @transform_3(%arg0: i32, %arg1: i32) -> (i32, i32) {
    %c0_i32 = arith.constant 0 : i32
    return %arg0, %arg1 : i32, i32
  }
  func.func @transform_4(%arg0: i32, %arg1: i32) -> (i32, i32) {
    %c0_i32 = arith.constant 0 : i32
    return %arg0, %arg1 : i32, i32
  }
}

</mosaic_0001>

<llo_original>
// kernel: tpu_custom_call.1
$region0: #{tpu_custom_call.1}
  #allocation0 [shape = 'u32[]', space=smem, size = 0x4, offset = 0x4, fixed_abs, tag = 'smem constant byte address 0x4 - core index']
  #allocation1 [shape = 'u32[72,128]{1,0:T(1,128)}', space=vmem, size = 0x9000, scoped, tag = 'internal scratch']
  %s0 = inlined_call_operand.hbm [shape: f32[16,128], index: 0, kind: input, shape index: {}]
  %s1 = inlined_call_operand.hbm [shape: f32[8,128], index: 1, kind: input, shape index: {}]
  %s2 = inlined_call_operand.hbm [shape: f32[16,128], index: 2, kind: output, shape index: {}]
  %s3 = sld [smem:[#allocation0]]
  $region49: #{tpu_custom_call.1} parent=0
    _
  %s5 = ssub.s32 1, %s3
  %s6 = scalar_select 0, %s5, %s3
  $region1: #{tpu_custom_call.1} parent=0
    #allocation2 [shape = 'u8[8192]{0}', space=vmem, size = 0x2000, scoped, tag = 'input window, operand 0']
    #allocation3 [shape = 's32[2]{0}', space=sflag, size = 0x8, scoped, tag = 'scoped memory for tpu_custom_call.1']
    #allocation4 [shape = 's32[2]{0}', space=sflag, size = 0x8, scoped, tag = 'scoped memory for tpu_custom_call.1']
    #allocation5 [shape = 'u8[4096]{0}', space=vmem, size = 0x1000, scoped, tag = 'input window, operand 1, single buffered']
    #allocation6 [shape = 's32[1]{0}', space=sflag, size = 0x4, scoped, tag = 'scoped memory for tpu_custom_call.1']
    #allocation7 [shape = 'u8[8192]{0}', space=vmem, size = 0x2000, scoped, tag = 'output window, operand 0']
    %7 = vsyncpa [#allocation3], 0
    %s8 = scalar_lea.sflag [#allocation3], 1
    %9 = vsyncpa %s8, 0
    %10 = vsyncpa [#allocation6], 0
    %11 = vsyncpa [#allocation4], 0
    %s12 = scalar_lea.sflag [#allocation4], 1
    %13 = vsyncpa %s12, 0
    loop: start=0, step=1, limit=4
    $region2: #{tpu_custom_call.1} parent=1 // loop_pre_header
      _
    $region3: #{tpu_custom_call.1} parent=1 // loop_header
      %s15 = sphi 0, %s19
      %p16 = scmp.ge.s32.totalorder %s15, 4
      %s25 = sphi 0, %s27
      %s28 = sphi 0, %s25
      %s29 = sphi 0, %s28
      %s45 = sphi 0, %s29
      %s49 = sphi 0, %s49
      %s51 = sphi 0, %s49
      %s52 = sphi 0, %s51
      %s66 = sphi 0, %s52
      %s72 = sphi 0, %s74
      %s75 = sphi 0, %s72
      %s76 = sphi 0, %s75
      %s92 = sphi 0, %s76
    $region4: #{tpu_custom_call.1} parent=1 // loop_header_branch
      %18 = sbr.rel (%p16) target = $region8
    $region5: #{tpu_custom_call.1} parent=1 // loop_body
      %s20 = ssub.s32 %s15, 1
      %s21 = ssub.s32 %s15, 2
      %s22 = sadd.s32 %s15, 1
      %s23 = ssub.s32 %s15, %s22
      %p24 = scmp.eq.s32.totalorder %s23, 0
      %s26 = sadd.s32 %s25, 1
      %s27 = scalar_select %p24, %s25, %s26
      %p30 = pneg %p24
      %p31 = scmp.eq.s32.totalorder %s15, 1
      %p32 = por %p30, %p31
      %p33 = scmp.ne.s32.totalorder %s25, %s28
      %p34 = scmp.eq.s32.totalorder %s15, 0
      %p35 = por %p33, %p34
      %p36 = scmp.ne.s32.totalorder %s25, %s28
      %p37 = scmp.eq.s32.totalorder %s20, 1
      %p38 = por %p36, %p37
      %p39 = scmp.ne.s32.totalorder %s28, %s29
      %p40 = scmp.eq.s32.totalorder %s20, 0
      %p41 = por %p39, %p40
      %p42 = scmp.ne.s32.totalorder %s28, %s29
      %p43 = scmp.eq.s32.totalorder %s21, 1
      %p44 = por %p42, %p43
      %p46 = scmp.ne.s32.totalorder %s29, %s45
      %p47 = scmp.eq.s32.totalorder %s21, 0
      %p48 = por %p46, %p47
      %s50 = sadd.s32 %s49, 1
      %p53 = scmp.eq.s32.totalorder %s15, 1
      %p54 = scmp.ne.s32.totalorder %s49, %s51
      %p55 = scmp.eq.s32.totalorder %s15, 0
      %p56 = por %p54, %p55
      %p57 = scmp.ne.s32.totalorder %s49, %s51
      %p58 = scmp.eq.s32.totalorder %s20, 1
      %p59 = por %p57, %p58
      %p60 = scmp.ne.s32.totalorder %s51, %s52
      %p61 = scmp.eq.s32.totalorder %s20, 0
      %p62 = por %p60, %p61
      %p63 = scmp.ne.s32.totalorder %s51, %s52
      %p64 = scmp.eq.s32.totalorder %s21, 1
      %p65 = por %p63, %p64
      %p67 = scmp.ne.s32.totalorder %s52, %s66
      %p68 = scmp.eq.s32.totalorder %s21, 0
      %p69 = por %p67, %p68
      %s70 = ssub.s32 %s15, %s22
      %p71 = scmp.eq.s32.totalorder %s70, 0
      %s73 = sadd.s32 %s72, 1
      %s74 = scalar_select %p71, %s72, %s73
      %p77 = pneg %p71
      %p78 = scmp.eq.s32.totalorder %s15, 1
      %p79 = por %p77, %p78
      %p80 = scmp.ne.s32.totalorder %s72, %s75
      %p81 = scmp.eq.s32.totalorder %s15, 0
      %p82 = por %p80, %p81
      %p83 = scmp.ne.s32.totalorder %s72, %s75
      %p84 = scmp.eq.s32.totalorder %s20, 1
      %p85 = por %p83, %p84
      %p86 = scmp.ne.s32.totalorder %s75, %s76
      %p87 = scmp.eq.s32.totalorder %s20, 0
      %p88 = por %p86, %p87
      %p89 = scmp.ne.s32.totalorder %s75, %s76
      %p90 = scmp.eq.s32.totalorder %s21, 1
      %p91 = por %p89, %p90
      %p93 = scmp.ne.s32.totalorder %s76, %s92
      %p94 = scmp.eq.s32.totalorder %s21, 0
      %p95 = por %p93, %p94
      %p96 = scmp.le.s32.totalorder 1, %s15
      %p97 = scmp.lt.s32.totalorder %s15, 3
      %p98 = pnand %p96, %p97
      %p99 = pneg %p98
      // Predicated region
      $region9: #{tpu_custom_call.1} parent=5 // pred_check
        _
      $region10: #{tpu_custom_call.1} parent=5 // pred_check_branch
        %101 = sbr.rel (%p98) target = $region12
      $region11: #{tpu_custom_call.1} parent=5 // pred_region
        %s102 = ssub.s32 %s15, 1
        // Predicated region
        $region13: #{tpu_custom_call.1} parent=11 // pred_check
          %p103 = pneg %p62
        $region14: #{tpu_custom_call.1} parent=11 // pred_check_branch
          %105 = sbr.rel (%p103) target = $region16
        $region15: #{tpu_custom_call.1} parent=11 // pred_region
          %107 = vsyncadd [#allocation6], 0
          %s109 = sshll.u32 %s1, 4
          %s110 = int_to_ptr.hbm [resolvable:$true] %s109
          %s111 = sshll.u32 [#allocation5], 4
          %s112 = int_to_ptr.vmem [resolvable:$true] %s111
          %114 = dma.hbm_to_vmem [thread:$0]  %s110, 128, %s112, [#allocation6]
        $region16: #{tpu_custom_call.1} parent=11 // pred_fallthru
          _
      $region12: #{tpu_custom_call.1} parent=5 // pred_fallthru
        _
      %p115 = scmp.lt.s32.totalorder %s15, 2
      // Predicated region
      $region17: #{tpu_custom_call.1} parent=5 // pred_check
        %p116 = pneg %p115
      $region18: #{tpu_custom_call.1} parent=5 // pred_check_branch
        %118 = sbr.rel (%p116) target = $region20
      $region19: #{tpu_custom_call.1} parent=5 // pred_region
        // Predicated region
        $region21: #{tpu_custom_call.1} parent=19 // pred_check
          %p119 = pneg %p35
        $region22: #{tpu_custom_call.1} parent=19 // pred_check_branch
          %121 = sbr.rel (%p119) target = $region24
        $region23: #{tpu_custom_call.1} parent=19 // pred_region
          %s122 = sand.u32 %s25, 1
          %s123 = scalar_lea.sflag [#allocation3], %s122
          %s124 = sand.u32 %s25, 1
          %s125 = smul.addr %s124, 8
          %s126 = scalar_lea.vmem [#allocation2], %s125
          %128 = vsyncadd %s123, 0
          %s129 = smul.addr %s15, 8
          %s130 = scalar_lea.hbm %s0, %s129
          %s132 = sshll.u32 %s130, 4
          %s133 = int_to_ptr.hbm [resolvable:$true] %s132
          %s134 = sshll.u32 %s126, 4
          %s135 = int_to_ptr.vmem [resolvable:$true] %s134
          %137 = dma.hbm_to_vmem [thread:$0]  %s133, 128, %s135, %s123
        $region24: #{tpu_custom_call.1} parent=19 // pred_fallthru
          _
      $region20: #{tpu_custom_call.1} parent=5 // pred_fallthru
        _
      %p138 = scmp.le.s32.totalorder 1, %s15
      %p139 = scmp.lt.s32.totalorder %s15, 3
      %p140 = pnand %p138, %p139
      %p141 = pneg %p140
      // Predicated region
      $region25: #{tpu_custom_call.1} parent=5 // pred_check
        _
      $region26: #{tpu_custom_call.1} parent=5 // pred_check_branch
        %143 = sbr.rel (%p140) target = $region28
      $region27: #{tpu_custom_call.1} parent=5 // pred_region
        %s144 = ssub.s32 %s15, 1
        %s145 = sand.u32 %s28, 1
        %s146 = scalar_lea.sflag [#allocation3], %s145
        %s147 = sand.u32 %s28, 1
        %s148 = smul.addr %s147, 8
        %s149 = scalar_lea.vmem [#allocation2], %s148
        // Predicated region
        $region29: #{tpu_custom_call.1} parent=27 // pred_check
          %p150 = pneg %p41
        $region30: #{tpu_custom_call.1} parent=27 // pred_check_branch
          %152 = sbr.rel (%p150) target = $region32
        $region31: #{tpu_custom_call.1} parent=27 // pred_region
          %154 = dma.done %s146, 128
        $region32: #{tpu_custom_call.1} parent=27 // pred_fallthru
          _
        // Predicated region
        $region33: #{tpu_custom_call.1} parent=27 // pred_check
          %p155 = pneg %p62
        $region34: #{tpu_custom_call.1} parent=27 // pred_check_branch
          %157 = sbr.rel (%p155) target = $region36
        $region35: #{tpu_custom_call.1} parent=27 // pred_region
          %159 = dma.done [#allocation6], 128
        $region36: #{tpu_custom_call.1} parent=27 // pred_fallthru
          _
        %s160 = sand.u32 %s28, 1
        %s161 = scalar_lea.sflag [#allocation3], %s160
        %s162 = sand.u32 %s28, 1
        %s163 = smul.addr %s162, 8
        %s164 = scalar_lea.vmem [#allocation2], %s163
        %p165 = pneg %p41
        %p166 = pneg %p38
        %p167 = pneg %p62
        %p168 = pneg %p59
        %p169 = pneg %p88
        %p170 = pneg %p85
        %s171 = sand.u32 %s75, 1
        %s172 = scalar_lea.sflag [#allocation4], %s171
        %s173 = sand.u32 %s75, 1
        %s174 = smul.addr %s173, 8
        %s175 = scalar_lea.vmem [#allocation7], %s174
        %v176 = vld [vmem:[%s149] sm:$0xff]
        %v177 = vld [vmem:[#allocation5] sm:$0xff]
        %v178 = vadd.f32 %v176, %v177
        %179 = vst [vmem:[%s175] sm:$0xff] %v178
        %s180 = sand.u32 %s75, 1
        %s181 = scalar_lea.sflag [#allocation4], %s180
        %s182 = sand.u32 %s75, 1
        %s183 = smul.addr %s182, 8
        %s184 = scalar_lea.vmem [#allocation7], %s183
        // Predicated region
        $region37: #{tpu_custom_call.1} parent=27 // pred_check
          %p185 = pneg %p85
        $region38: #{tpu_custom_call.1} parent=27 // pred_check_branch
          %187 = sbr.rel (%p185) target = $region40
        $region39: #{tpu_custom_call.1} parent=27 // pred_region
          %189 = vsyncadd %s181, 0
          %s190 = smul.addr %s20, 8
          %s191 = scalar_lea.hbm %s2, %s190
          %s193 = sshll.u32 %s184, 4
          %s194 = int_to_ptr.vmem [resolvable:$true] %s193
          %s195 = sshll.u32 %s191, 4
          %s196 = int_to_ptr.hbm [resolvable:$true] %s195
          %198 = dma.vmem_to_hbm [thread:$0]  %s194, 128, %s196, %s181
        $region40: #{tpu_custom_call.1} parent=27 // pred_fallthru
          _
      $region28: #{tpu_custom_call.1} parent=5 // pred_fallthru
        _
      %p199 = scmp.le.s32.totalorder 2, %s15
      // Predicated region
      $region41: #{tpu_custom_call.1} parent=5 // pred_check
        %p200 = pneg %p199
      $region42: #{tpu_custom_call.1} parent=5 // pred_check_branch
        %202 = sbr.rel (%p200) target = $region44
      $region43: #{tpu_custom_call.1} parent=5 // pred_region
        %s203 = ssub.s32 %s15, 2
        // Predicated region
        $region45: #{tpu_custom_call.1} parent=43 // pred_check
          %p204 = pneg %p91
        $region46: #{tpu_custom_call.1} parent=43 // pred_check_branch
          %206 = sbr.rel (%p204) target = $region48
        $region47: #{tpu_custom_call.1} parent=43 // pred_region
          %s207 = sand.u32 %s76, 1
          %s208 = scalar_lea.sflag [#allocation4], %s207
          %s209 = sand.u32 %s76, 1
          %s210 = smul.addr %s209, 8
          %s211 = scalar_lea.vmem [#allocation7], %s210
          %213 = dma.done %s208, 128
        $region48: #{tpu_custom_call.1} parent=43 // pred_fallthru
          _
      $region44: #{tpu_custom_call.1} parent=5 // pred_fallthru
        _
    $region6: #{tpu_custom_call.1} parent=1 // loop_footer
      %s19 = sadd.s32 1, %s15
    $region7: #{tpu_custom_call.1} parent=1 // loop_footer_branch
      %14 = sbr.rel target = $region3
    $region8: #{tpu_custom_call.1} parent=1 // loop_exit
      _
    %214 = vsyncpa [#allocation3], 1
    %s215 = scalar_lea.sflag [#allocation3], 1
    %216 = vsyncpa %s215, 1
    %217 = vsyncpa [#allocation6], 1
    %218 = vsyncpa [#allocation4], 1
    %s219 = scalar_lea.sflag [#allocation4], 1
    %220 = vsyncpa %s219, 1

// kernel: tpu_custom_call.1
$region0: #{tpu_custom_call.1}
  #allocation0 [shape = 'u32[]', space=smem, size = 0x4, offset = 0x4, fixed_abs, tag = 'smem constant byte address 0x4 - core index']
  #allocation1 [shape = 'u32[72,128]{1,0:T(1,128)}', space=vmem, size = 0x9000, scoped, tag = 'internal scratch']
  %s0 = inlined_call_operand.hbm [shape: f32[16,128], index: 0, kind: input, shape index: {}]
  %s1 = inlined_call_operand.hbm [shape: f32[2,128,128], index: 1, kind: input, shape index: {}]
  %s2 = inlined_call_operand.hbm [shape: f32[2,1,128], index: 2, kind: input, shape index: {}]
  %s3 = inlined_call_operand.hbm [shape: f32[16,128], index: 3, kind: output, shape index: {0}]
  %s4 = inlined_call_operand.hbm [shape: f32[16,128], index: 4, kind: output, shape index: {1}]
  %5 = xla_tuple %s3, %s4
  %s6 = sld [smem:[#allocation0]]
  $region42: #{tpu_custom_call.1} parent=0
    _
  %s8 = ssub.s32 1, %s6
  %s9 = scalar_select 0, %s8, %s6
  $region1: #{tpu_custom_call.1} parent=0
    #allocation2 [shape = 'u8[8192]{0}', space=vmem, size = 0x2000, scoped, tag = 'input window, operand 0, single buffered']
    #allocation3 [shape = 's32[1]{0}', space=sflag, size = 0x4, scoped, tag = 'scoped memory for tpu_custom_call.1']
    #allocation4 [shape = 's32[1]{0}', space=sflag, size = 0x4, scoped, tag = 'scoped memory for tpu_custom_call.1']
    #allocation5 [shape = 'u8[131072]{0}', space=vmem, size = 0x20000, scoped, tag = 'input window, operand 1, single buffered']
    #allocation6 [shape = 's32[1]{0}', space=sflag, size = 0x4, scoped, tag = 'scoped memory for tpu_custom_call.1']
    #allocation7 [shape = 'u8[1024]{0}', space=vmem, size = 0x400, scoped, tag = 'input window, operand 2, single buffered']
    #allocation8 [shape = 'u8[8192]{0}', space=vmem, size = 0x2000, scoped, tag = 'output window, operand 0, single buffered']
    #allocation9 [shape = 'u8[8192]{0}', space=vmem, size = 0x2000, scoped, tag = 'output window, operand 1, single buffered']
    #allocation10 [shape = 's32[1]{0}', space=sflag, size = 0x4, scoped, tag = 'scoped memory for tpu_custom_call.1']
    %10 = vsyncpa [#allocation3], 0
    %11 = vsyncpa [#allocation6], 0
    %12 = vsyncpa [#allocation4], 0
    %13 = vsyncpa [#allocation10], 0
    // Predicated region
    $region2: #{tpu_custom_call.1} parent=1 // pred_check
      _
    $region3: #{tpu_custom_call.1} parent=1 // pred_check_branch
      %15 = sbr.rel (0) target = $region5
    $region4: #{tpu_custom_call.1} parent=1 // pred_region
      %17 = vsyncadd [#allocation3], 0
      %s18 = sshll.u32 %s0, 4
      %s19 = int_to_ptr.hbm [resolvable:$true] %s18
      %s20 = sshll.u32 [#allocation2], 4
      %s21 = int_to_ptr.vmem [resolvable:$true] %s20
      %26 = dma.hbm_to_vmem [thread:$0]  %s19, 256, %s21, [#allocation3], 128, 128, 8
    $region5: #{tpu_custom_call.1} parent=1 // pred_fallthru
      _
    // Predicated region
    $region6: #{tpu_custom_call.1} parent=1 // pred_check
      _
    $region7: #{tpu_custom_call.1} parent=1 // pred_check_branch
      %28 = sbr.rel (0) target = $region9
    $region8: #{tpu_custom_call.1} parent=1 // pred_region
      %30 = vsyncadd [#allocation6], 0
      %s31 = sshll.u32 %s1, 4
      %s32 = int_to_ptr.hbm [resolvable:$true] %s31
      %s33 = sshll.u32 [#allocation5], 4
      %s34 = int_to_ptr.vmem [resolvable:$true] %s33
      %39 = dma.hbm_to_vmem [thread:$0]  %s32, 4096, %s34, [#allocation6], 128, 128, 8
    $region9: #{tpu_custom_call.1} parent=1 // pred_fallthru
      _
    // Predicated region
    $region10: #{tpu_custom_call.1} parent=1 // pred_check
      _
    $region11: #{tpu_custom_call.1} parent=1 // pred_check_branch
      %41 = sbr.rel (0) target = $region13
    $region12: #{tpu_custom_call.1} parent=1 // pred_region
      %43 = vsyncadd [#allocation6], 0
      %s44 = sshll.u32 %s2, 4
      %s45 = int_to_ptr.hbm [resolvable:$true] %s44
      %s46 = sshll.u32 [#allocation7], 4
      %s47 = int_to_ptr.vmem [resolvable:$true] %s46
      %52 = dma.hbm_to_vmem [thread:$0]  %s45, 32, %s47, [#allocation6], 16, 16, 1
    $region13: #{tpu_custom_call.1} parent=1 // pred_fallthru
      _
    // Predicated region
    $region14: #{tpu_custom_call.1} parent=1 // pred_check
      _
    $region15: #{tpu_custom_call.1} parent=1 // pred_check_branch
      %54 = sbr.rel (0) target = $region17
    $region16: #{tpu_custom_call.1} parent=1 // pred_region
      %56 = dma.done [#allocation3], 256
    $region17: #{tpu_custom_call.1} parent=1 // pred_fallthru
      _
    // Predicated region
    $region18: #{tpu_custom_call.1} parent=1 // pred_check
      _
    $region19: #{tpu_custom_call.1} parent=1 // pred_check_branch
      %58 = sbr.rel (0) target = $region21
    $region20: #{tpu_custom_call.1} parent=1 // pred_region
      %60 = dma.done [#allocation6], 4096
    $region21: #{tpu_custom_call.1} parent=1 // pred_fallthru
      _
    // Predicated region
    $region22: #{tpu_custom_call.1} parent=1 // pred_check
      _
    $region23: #{tpu_custom_call.1} parent=1 // pred_check_branch
      %62 = sbr.rel (0) target = $region25
    $region24: #{tpu_custom_call.1} parent=1 // pred_region
      %64 = dma.done [#allocation6], 32
    $region25: #{tpu_custom_call.1} parent=1 // pred_fallthru
      _
    %v65 = vld [vmem:[#allocation2] sm:$0xff]
    %v66 = vld [vmem:[#allocation2 + $0x8] sm:$0xff]
    %v67 = vld [vmem:[#allocation5] sm:$0xff]
    %v68 = vld [vmem:[#allocation5 + $0x8] sm:$0xff]
    %v69 = vld [vmem:[#allocation5 + $0x10] sm:$0xff]
    %v70 = vld [vmem:[#allocation5 + $0x18] sm:$0xff]
    %v71 = vld [vmem:[#allocation5 + $0x20] sm:$0xff]
    %v72 = vld [vmem:[#allocation5 + $0x28] sm:$0xff]
    %v73 = vld [vmem:[#allocation5 + $0x30] sm:$0xff]
    %v74 = vld [vmem:[#allocation5 + $0x38] sm:$0xff]
    %v75 = vld [vmem:[#allocation5 + $0x40] sm:$0xff]
    %v76 = vld [vmem:[#allocation5 + $0x48] sm:$0xff]
    %v77 = vld [vmem:[#allocation5 + $0x50] sm:$0xff]
    %v78 = vld [vmem:[#allocation5 + $0x58] sm:$0xff]
    %v79 = vld [vmem:[#allocation5 + $0x60] sm:$0xff]
    %v80 = vld [vmem:[#allocation5 + $0x68] sm:$0xff]
    %v81 = vld [vmem:[#allocation5 + $0x70] sm:$0xff]
    %v82 = vld [vmem:[#allocation5 + $0x78] sm:$0xff]
    %v83 = vld [vmem:[#allocation7] sm:$0x1]
    %v85 = vperm.slane %v83, 0
    %87 = vmatpush.msra.mxu0 %v82
    %88 = vmatpush.msra.mxu0 %v81
    %89 = vmatpush.msra.mxu0 %v80
    %90 = vmatpush.msra.mxu0 %v79
    %91 = vmatpush.msra.mxu0 %v78
    %92 = vmatpush.msra.mxu0 %v77
    %93 = vmatpush.msra.mxu0 %v76
    %94 = vmatpush.msra.mxu0 %v75
    %95 = vmatpush.msra.mxu0 %v74
    %96 = vmatpush.msra.mxu0 %v73
    %97 = vmatpush.msra.mxu0 %v72
    %98 = vmatpush.msra.mxu0 %v71
    %99 = vmatpush.msra.mxu0 %v70
    %100 = vmatpush.msra.mxu0 %v69
    %101 = vmatpush.msra.mxu0 %v68
    %102 = vmatpush.msra.mxu0 %v67
    %103 = vmatmul.f32.gmra.mxu0 %v65
    %v104 = vpop.f32.mrf.mxu0
    %v105 = vadd.f32 %v85, %v104
    %106 = vmatmul.f32.gmra.mxu0 %v66
    %v107 = vpop.f32.mrf.mxu0
    %v108 = vadd.f32 %v85, %v107
    %109 = vdwg.mxu0
    %s110 = scalar_lea.vmem [#allocation5], 128
    %v111 = vld [vmem:[%s110] sm:$0xff]
    %v112 = vld [vmem:[%s110 + $0x8] sm:$0xff]
    %v113 = vld [vmem:[%s110 + $0x10] sm:$0xff]
    %v114 = vld [vmem:[%s110 + $0x18] sm:$0xff]
    %v115 = vld [vmem:[%s110 + $0x20] sm:$0xff]
    %v116 = vld [vmem:[%s110 + $0x28] sm:$0xff]
    %v117 = vld [vmem:[%s110 + $0x30] sm:$0xff]
    %v118 = vld [vmem:[%s110 + $0x38] sm:$0xff]
    %v119 = vld [vmem:[%s110 + $0x40] sm:$0xff]
    %v120 = vld [vmem:[%s110 + $0x48] sm:$0xff]
    %v121 = vld [vmem:[%s110 + $0x50] sm:$0xff]
    %v122 = vld [vmem:[%s110 + $0x58] sm:$0xff]
    %v123 = vld [vmem:[%s110 + $0x60] sm:$0xff]
    %v124 = vld [vmem:[%s110 + $0x68] sm:$0xff]
    %v125 = vld [vmem:[%s110 + $0x70] sm:$0xff]
    %v126 = vld [vmem:[%s110 + $0x78] sm:$0xff]
    %s127 = scalar_lea.vmem [#allocation7], 1
    %v128 = vld [vmem:[%s127] sm:$0x1]
    %v130 = vperm.slane %v128, 0
    %132 = vmatpush.msra.mxu0 %v126
    %133 = vmatpush.msra.mxu0 %v125
    %134 = vmatpush.msra.mxu0 %v124
    %135 = vmatpush.msra.mxu0 %v123
    %136 = vmatpush.msra.mxu0 %v122
    %137 = vmatpush.msra.mxu0 %v121
    %138 = vmatpush.msra.mxu0 %v120
    %139 = vmatpush.msra.mxu0 %v119
    %140 = vmatpush.msra.mxu0 %v118
    %141 = vmatpush.msra.mxu0 %v117
    %142 = vmatpush.msra.mxu0 %v116
    %143 = vmatpush.msra.mxu0 %v115
    %144 = vmatpush.msra.mxu0 %v114
    %145 = vmatpush.msra.mxu0 %v113
    %146 = vmatpush.msra.mxu0 %v112
    %147 = vmatpush.msra.mxu0 %v111
    %148 = vmatmul.f32.gmra.mxu0 %v65
    %v149 = vpop.f32.mrf.mxu0
    %v150 = vadd.f32 %v130, %v149
    %151 = vmatmul.f32.gmra.mxu0 %v66
    %v152 = vpop.f32.mrf.mxu0
    %v153 = vadd.f32 %v130, %v152
    %154 = vdwg.mxu0
    %v155 = vmul.f32 %v150, 0.5
    %v156 = vmul.f32 %v153, 0.5
    %v157 = vtanh.pop %v155
    %v158 = vtanh.pop %v156
    %v159 = vadd.f32 %v157, 1.0
    %v160 = vadd.f32 %v158, 1.0
    %v161 = vmul.f32 %v159, 0.5
    %v162 = vmul.f32 %v160, 0.5
    %v163 = vtanh.pop %v105
    %v164 = vtanh.pop %v108
    %v165 = vmul.f32 %v161, %v163
    %v166 = vmul.f32 %v162, %v164
    %167 = vst [vmem:[#allocation9] sm:$0xff] %v105
    %168 = vst [vmem:[#allocation9 + $0x8] sm:$0xff] %v108
    %169 = vst [vmem:[#allocation8] sm:$0xff] %v165
    %170 = vst [vmem:[#allocation8 + $0x8] sm:$0xff] %v166
    // Predicated region
    $region26: #{tpu_custom_call.1} parent=1 // pred_check
      _
    $region27: #{tpu_custom_call.1} parent=1 // pred_check_branch
      %172 = sbr.rel (0) target = $region29
    $region28: #{tpu_custom_call.1} parent=1 // pred_region
      %174 = vsyncadd [#allocation4], 0
      %s175 = sshll.u32 [#allocation8], 4
      %s176 = int_to_ptr.vmem [resolvable:$true] %s175
      %s177 = sshll.u32 %s3, 4
      %s178 = int_to_ptr.hbm [resolvable:$true] %s177
      %183 = dma.vmem_to_hbm [thread:$0]  %s176, 256, %s178, [#allocation4], 128, 128, 8
    $region29: #{tpu_custom_call.1} parent=1 // pred_fallthru
      _
    // Predicated region
    $region30: #{tpu_custom_call.1} parent=1 // pred_check
      _
    $region31: #{tpu_custom_call.1} parent=1 // pred_check_branch
      %185 = sbr.rel (0) target = $region33
    $region32: #{tpu_custom_call.1} parent=1 // pred_region
      %187 = vsyncadd [#allocation10], 0
      %s188 = sshll.u32 [#allocation9], 4
      %s189 = int_to_ptr.vmem [resolvable:$true] %s188
      %s190 = sshll.u32 %s4, 4
      %s191 = int_to_ptr.hbm [resolvable:$true] %s190
      %196 = dma.vmem_to_hbm [thread:$0]  %s189, 256, %s191, [#allocation10], 128, 128, 8
    $region33: #{tpu_custom_call.1} parent=1 // pred_fallthru
      _
    // Predicated region
    $region34: #{tpu_custom_call.1} parent=1 // pred_check
      _
    $region35: #{tpu_custom_call.1} parent=1 // pred_check_branch
      %198 = sbr.rel (0) target = $region37
    $region36: #{tpu_custom_call.1} parent=1 // pred_region
      %200 = dma.done [#allocation4], 256
    $region37: #{tpu_custom_call.1} parent=1 // pred_fallthru
      _
    // Predicated region
    $region38: #{tpu_custom_call.1} parent=1 // pred_check
      _
    $region39: #{tpu_custom_call.1} parent=1 // pred_check_branch
      %202 = sbr.rel (0) target = $region41
    $region40: #{tpu_custom_call.1} parent=1 // pred_region
      %204 = dma.done [#allocation10], 256
    $region41: #{tpu_custom_call.1} parent=1 // pred_fallthru
      _
    %205 = vsyncpa [#allocation3], 1
    %206 = vsyncpa [#allocation6], 1
    %207 = vsyncpa [#allocation4], 1
    %208 = vsyncpa [#allocation10], 1

</llo_original>
